<compile_context>
chip_gen: v7x
topology: tpu7x:2x2x1
jax: 0.10.0
libtpu: 0.0.40
codegen_flags: <defaults>
</compile_context>

<pallas_src>
import functools

import jax
import jax.numpy as jnp
from jax.experimental import pallas as pl
from jax.experimental.pallas import tpu as pltpu

IN_DIM = 4
H1 = 20
H2 = 10
OUT_DIM = 3


def mlp_kernel(x_ref, w1_ref, b1_ref, w2_ref, b2_ref, w3_ref, b3_ref, o_ref):
    # x_ref: (IN_DIM, TILE_B)   weights: (out, in)   biases: (out, 1)
    x = x_ref[...]
    h = jnp.dot(w1_ref[...], x, preferred_element_type=jnp.float32)
    h = jnp.maximum(h + b1_ref[...], 0.0)                      # (H1, TILE_B)
    h = jnp.dot(w2_ref[...], h.astype(w2_ref.dtype),
                preferred_element_type=jnp.float32)
    h = jnp.maximum(h + b2_ref[...], 0.0)                      # (H2, TILE_B)
    y = jnp.dot(w3_ref[...], h.astype(w3_ref.dtype),
                preferred_element_type=jnp.float32)
    y = jnp.maximum(y + b3_ref[...], 0.0)                      # (OUT, TILE_B)
    o_ref[...] = y.astype(o_ref.dtype)


@functools.partial(jax.jit, static_argnames=("tile_b", "compute_dtype"))
def net_forward(x, params, *, tile_b=2048, compute_dtype=jnp.float32):
    """x: (N, 4).  params: PyTorch-layout weights w=(out,in), b=(out,1).

    Returns (N, 3) float32.  Set compute_dtype=jnp.bfloat16 on v6e/v7x to
    halve HBM traffic on the x/weight streams (output stays f32).
    """
    n = x.shape[0]
    assert x.shape[1] == IN_DIM
    assert tile_b % 128 == 0

    # Pad batch to a lane-aligned multiple of the tile; pick the tile so the
    # small-batch case still uses a single 128-wide block.
    n_pad = max(128, ((n + 127) // 128) * 128)
    tb = min(tile_b, n_pad)
    n_pad = ((n_pad + tb - 1) // tb) * tb
    grid = (n_pad // tb,)

    # Transposed, padded input: (IN_DIM, n_pad) — layout plumbing on the host.
    x_t = jnp.asarray(x, compute_dtype).T
    if n_pad != n:
        x_t = jnp.pad(x_t, ((0, 0), (0, n_pad - n)))

    w1 = jnp.asarray(params["w1"], compute_dtype)
    w2 = jnp.asarray(params["w2"], compute_dtype)
    w3 = jnp.asarray(params["w3"], compute_dtype)
    b1 = jnp.asarray(params["b1"], jnp.float32)
    b2 = jnp.asarray(params["b2"], jnp.float32)
    b3 = jnp.asarray(params["b3"], jnp.float32)

    # Weights/biases stay resident in VMEM for the whole grid.
    def resident(a):
        return pl.BlockSpec(a.shape, lambda i: (0,) * a.ndim)

    flops = 2 * n_pad * (IN_DIM * H1 + H1 * H2 + H2 * OUT_DIM)
    bytes_accessed = (
        x_t.size * x_t.dtype.itemsize            # input stream
        + n_pad * OUT_DIM * 4                    # output stream
        + sum(int(p.size) * 4 for p in (w1, b1, w2, b2, w3, b3))
    )

    out_t = pl.pallas_call(
        mlp_kernel,
        out_shape=jax.ShapeDtypeStruct((OUT_DIM, n_pad), jnp.float32),
        grid=grid,
        in_specs=[
            pl.BlockSpec((IN_DIM, tb), lambda i: (0, i)),
            resident(w1), resident(b1),
            resident(w2), resident(b2),
            resident(w3), resident(b3),
        ],
        out_specs=pl.BlockSpec((OUT_DIM, tb), lambda i: (0, i)),
        compiler_params=pltpu.CompilerParams(
            dimension_semantics=("parallel",)),
        cost_estimate=pl.CostEstimate(
            flops=flops, transcendentals=0, bytes_accessed=bytes_accessed),
    )(x_t, w1, b1, w2, b2, w3, b3)

    return out_t[:, :n].T                         # back to (N, OUT_DIM)


def init_params(key):
    """Deterministic init mimicking PyTorch Linear (U[-1/sqrt(fan_in), +])."""
    ks = jax.random.split(key, 6)

    def linear(kw, kb, fan_in, fan_out):
        bound = 1.0 / jnp.sqrt(float(fan_in))
        w = jax.random.uniform(kw, (fan_out, fan_in), jnp.float32, -bound, bound)
        b = jax.random.uniform(kb, (fan_out, 1), jnp.float32, -bound, bound)
        return w, b

    w1, b1 = linear(ks[0], ks[1], IN_DIM, H1)
    w2, b2 = linear(ks[2], ks[3], H1, H2)
    w3, b3 = linear(ks[4], ks[5], H2, OUT_DIM)
    return {"w1": w1, "b1": b1, "w2": w2, "b2": b2, "w3": w3, "b3": b3}


def reference_forward(x, p):
    # Row-major reference matching the PyTorch module (ReLU after every
    # layer, including l3 — that is what the original Net.forward does).
    h = jnp.maximum(x @ p["w1"].T + p["b1"].T, 0.0)
    h = jnp.maximum(h @ p["w2"].T + p["b2"].T, 0.0)
    return jnp.maximum(h @ p["w3"].T + p["b3"].T, 0.0)


if __name__ == "__main__":
    key = jax.random.PRNGKey(0)
    kx, kp = jax.random.split(key)
    x = jax.random.normal(kx, (8, IN_DIM), jnp.float32)   # batch=8, features=4
    params = init_params(kp)

    out = net_forward(x, params)
    out = jax.block_until_ready(out)

    ref = reference_forward(x, params)
    assert out.shape == (8, OUT_DIM)
    assert jnp.allclose(out, ref, atol=1e-4, rtol=1e-4)
    print("KERNEL_OK")
</pallas_src>

<mosaic_0001>
module attributes {stable_mosaic.version = 11 : i64} {
  func.func @mlp_kernel(%arg0: i32, %arg1: memref<4x128xf32, #tpu.memory_space<vmem>>, %arg2: memref<20x4xf32, #tpu.memory_space<vmem>>, %arg3: memref<20x1xf32, #tpu.memory_space<vmem>>, %arg4: memref<10x20xf32, #tpu.memory_space<vmem>>, %arg5: memref<10x1xf32, #tpu.memory_space<vmem>>, %arg6: memref<3x10xf32, #tpu.memory_space<vmem>>, %arg7: memref<3x1xf32, #tpu.memory_space<vmem>>, %arg8: memref<3x128xf32, #tpu.memory_space<vmem>>) attributes {dimension_semantics = [#tpu.dimension_semantics<parallel>], iteration_bounds = array<i64: 1>, scalar_prefetch = 0 : i64, scratch_operands = 0 : i64, tpu.core_type = #tpu.core_type<tc>, window_params = [{transform_indices = @transform_0, window_bounds = array<i64: 4, 128>}, {pipeline_mode = #tpu.pipeline_mode<synchronous>, transform_indices = @transform_1, window_bounds = array<i64: 20, 4>}, {pipeline_mode = #tpu.pipeline_mode<synchronous>, transform_indices = @transform_2, window_bounds = array<i64: 20, 1>}, {pipeline_mode = #tpu.pipeline_mode<synchronous>, transform_indices = @transform_3, window_bounds = array<i64: 10, 20>}, {pipeline_mode = #tpu.pipeline_mode<synchronous>, transform_indices = @transform_4, window_bounds = array<i64: 10, 1>}, {pipeline_mode = #tpu.pipeline_mode<synchronous>, transform_indices = @transform_5, window_bounds = array<i64: 3, 10>}, {pipeline_mode = #tpu.pipeline_mode<synchronous>, transform_indices = @transform_6, window_bounds = array<i64: 3, 1>}, {transform_indices = @transform_7, window_bounds = array<i64: 3, 128>}]} {
    %c0 = arith.constant 0 : index
    %c0_0 = arith.constant 0 : index
    %0 = vector.load %arg1[%c0, %c0_0] : memref<4x128xf32, #tpu.memory_space<vmem>>, vector<4x128xf32>
    %c0_1 = arith.constant 0 : index
    %c0_2 = arith.constant 0 : index
    %1 = vector.load %arg2[%c0_1, %c0_2] : memref<20x4xf32, #tpu.memory_space<vmem>>, vector<20x4xf32>
    %cst = arith.constant dense<0.000000e+00> : vector<20x128xf32>
    %2 = tpu.matmul %1, %0, %cst {dimension_numbers = #tpu.dot_dimension_numbers<[1], [0], [0], [1], [0, 0, 1, 1], [], []>} : vector<20x4xf32>, vector<4x128xf32>, vector<20x128xf32> -> vector<20x128xf32>
    %c0_3 = arith.constant 0 : index
    %c0_4 = arith.constant 0 : index
    %3 = vector.load %arg3[%c0_3, %c0_4] : memref<20x1xf32, #tpu.memory_space<vmem>>, vector<20x1xf32>
    %4 = vector.broadcast %3 : vector<20x1xf32> to vector<20x128xf32>
    %5 = arith.addf %2, %4 : vector<20x128xf32>
    %cst_5 = arith.constant 0.000000e+00 : f32
    %6 = vector.broadcast %cst_5 : f32 to vector<20x128xf32>
    %7 = arith.maximumf %5, %6 : vector<20x128xf32>
    %c0_6 = arith.constant 0 : index
    %c0_7 = arith.constant 0 : index
    %8 = vector.load %arg4[%c0_6, %c0_7] : memref<10x20xf32, #tpu.memory_space<vmem>>, vector<10x20xf32>
    %cst_8 = arith.constant dense<0.000000e+00> : vector<10x128xf32>
    %9 = tpu.matmul %8, %7, %cst_8 {dimension_numbers = #tpu.dot_dimension_numbers<[1], [0], [0], [1], [0, 0, 1, 1], [], []>} : vector<10x20xf32>, vector<20x128xf32>, vector<10x128xf32> -> vector<10x128xf32>
    %c0_9 = arith.constant 0 : index
    %c0_10 = arith.constant 0 : index
    %10 = vector.load %arg5[%c0_9, %c0_10] : memref<10x1xf32, #tpu.memory_space<vmem>>, vector<10x1xf32>
    %11 = vector.broadcast %10 : vector<10x1xf32> to vector<10x128xf32>
    %12 = arith.addf %9, %11 : vector<10x128xf32>
    %cst_11 = arith.constant 0.000000e+00 : f32
    %13 = vector.broadcast %cst_11 : f32 to vector<10x128xf32>
    %14 = arith.maximumf %12, %13 : vector<10x128xf32>
    %c0_12 = arith.constant 0 : index
    %c0_13 = arith.constant 0 : index
    %15 = vector.load %arg6[%c0_12, %c0_13] : memref<3x10xf32, #tpu.memory_space<vmem>>, vector<3x10xf32>
    %cst_14 = arith.constant dense<0.000000e+00> : vector<3x128xf32>
    %16 = tpu.matmul %15, %14, %cst_14 {dimension_numbers = #tpu.dot_dimension_numbers<[1], [0], [0], [1], [0, 0, 1, 1], [], []>} : vector<3x10xf32>, vector<10x128xf32>, vector<3x128xf32> -> vector<3x128xf32>
    %c0_15 = arith.constant 0 : index
    %c0_16 = arith.constant 0 : index
    %17 = vector.load %arg7[%c0_15, %c0_16] : memref<3x1xf32, #tpu.memory_space<vmem>>, vector<3x1xf32>
    %18 = vector.broadcast %17 : vector<3x1xf32> to vector<3x128xf32>
    %19 = arith.addf %16, %18 : vector<3x128xf32>
    %cst_17 = arith.constant 0.000000e+00 : f32
    %20 = vector.broadcast %cst_17 : f32 to vector<3x128xf32>
    %21 = arith.maximumf %19, %20 : vector<3x128xf32>
    %c0_18 = arith.constant 0 : index
    %c0_19 = arith.constant 0 : index
    %22 = vector.load %arg8[%c0_18, %c0_19] : memref<3x128xf32, #tpu.memory_space<vmem>>, vector<3x128xf32>
    tpu.vector_store %arg8[%c0_18, %c0_19], %21 {strides = array<i32>} : memref<3x128xf32, #tpu.memory_space<vmem>>, vector<3x128xf32>,
    return
  }
  func.func @transform_0(%arg0: i32) -> (i32, i32) {
    %c0_i32 = arith.constant 0 : i32
    %c0_i32_0 = arith.constant 0 : i32
    return %c0_i32, %arg0 : i32, i32
  }
  func.func @transform_1(%arg0: i32) -> (i32, i32) {
    %c0_i32 = arith.constant 0 : i32
    %c0_i32_0 = arith.constant 0 : i32
    %c0_i32_1 = arith.constant 0 : i32
    return %c0_i32, %c0_i32_0 : i32, i32
  }
  func.func @transform_2(%arg0: i32) -> (i32, i32) {
    %c0_i32 = arith.constant 0 : i32
    %c0_i32_0 = arith.constant 0 : i32
    %c0_i32_1 = arith.constant 0 : i32
    return %c0_i32, %c0_i32_0 : i32, i32
  }
  func.func @transform_3(%arg0: i32) -> (i32, i32) {
    %c0_i32 = arith.constant 0 : i32
    %c0_i32_0 = arith.constant 0 : i32
    %c0_i32_1 = arith.constant 0 : i32
    return %c0_i32, %c0_i32_0 : i32, i32
  }
  func.func @transform_4(%arg0: i32) -> (i32, i32) {
    %c0_i32 = arith.constant 0 : i32
    %c0_i32_0 = arith.constant 0 : i32
    %c0_i32_1 = arith.constant 0 : i32
    return %c0_i32, %c0_i32_0 : i32, i32
  }
  func.func @transform_5(%arg0: i32) -> (i32, i32) {
    %c0_i32 = arith.constant 0 : i32
    %c0_i32_0 = arith.constant 0 : i32
    %c0_i32_1 = arith.constant 0 : i32
    return %c0_i32, %c0_i32_0 : i32, i32
  }
  func.func @transform_6(%arg0: i32) -> (i32, i32) {
    %c0_i32 = arith.constant 0 : i32
    %c0_i32_0 = arith.constant 0 : i32
    %c0_i32_1 = arith.constant 0 : i32
    return %c0_i32, %c0_i32_0 : i32, i32
  }
  func.func @transform_7(%arg0: i32) -> (i32, i32) {
    %c0_i32 = arith.constant 0 : i32
    %c0_i32_0 = arith.constant 0 : i32
    return %c0_i32, %arg0 : i32, i32
  }
}

</mosaic_0001>

<llo_original>
// kernel: net_forward.1
$region0: #{net_forward.1}
  #allocation0 [shape = 'u32[]', space=smem, size = 0x4, offset = 0x4, fixed_abs, tag = 'smem constant byte address 0x4 - core index']
  #allocation1 [shape = 'u32[144,128]{1,0:T(1,128)}', space=vmem, size = 0x12000, scoped, tag = 'internal scratch']
  %s0 = inlined_call_operand.vmem [shape: f32[4,128], index: 0, kind: input, shape index: {}]
  %s1 = inlined_call_operand.vmem [shape: f32[20,4], index: 1, kind: input, shape index: {}]
  %s2 = inlined_call_operand.vmem [shape: f32[20,1], index: 2, kind: input, shape index: {}]
  %s3 = inlined_call_operand.vmem [shape: f32[10,20], index: 3, kind: input, shape index: {}]
  %s4 = inlined_call_operand.vmem [shape: f32[10,1], index: 4, kind: input, shape index: {}]
  %s5 = inlined_call_operand.vmem [shape: f32[3,10], index: 5, kind: input, shape index: {}]
  %s6 = inlined_call_operand.vmem [shape: f32[3,1], index: 6, kind: input, shape index: {}]
  %s7 = inlined_call_operand.vmem [shape: f32[3,128], index: 7, kind: output, shape index: {}]
  %s8 = sld [smem:[#allocation0]]
  $region38: #{net_forward.1} parent=0
    _
  %s10 = ssub.s32 1, %s8
  %s11 = scalar_select 0, %s10, %s8
  // Predicated region
  $region2: #{net_forward.1} parent=0 // pred_check
    _
  $region3: #{net_forward.1} parent=0 // pred_check_branch
    %13 = sbr.rel (0) target = $region5
  $region4: #{net_forward.1} parent=0 // pred_region
    _
  $region5: #{net_forward.1} parent=0 // pred_fallthru
    _
  // Predicated region
  $region6: #{net_forward.1} parent=0 // pred_check
    _
  $region7: #{net_forward.1} parent=0 // pred_check_branch
    %15 = sbr.rel (0) target = $region9
  $region8: #{net_forward.1} parent=0 // pred_region
    _
  $region9: #{net_forward.1} parent=0 // pred_fallthru
    _
  // Predicated region
  $region10: #{net_forward.1} parent=0 // pred_check
    _
  $region11: #{net_forward.1} parent=0 // pred_check_branch
    %17 = sbr.rel (0) target = $region13
  $region12: #{net_forward.1} parent=0 // pred_region
    _
  $region13: #{net_forward.1} parent=0 // pred_fallthru
    _
  // Predicated region
  $region14: #{net_forward.1} parent=0 // pred_check
    _
  $region15: #{net_forward.1} parent=0 // pred_check_branch
    %19 = sbr.rel (0) target = $region17
  $region16: #{net_forward.1} parent=0 // pred_region
    _
  $region17: #{net_forward.1} parent=0 // pred_fallthru
    _
  // Predicated region
  $region18: #{net_forward.1} parent=0 // pred_check
    _
  $region19: #{net_forward.1} parent=0 // pred_check_branch
    %21 = sbr.rel (0) target = $region21
  $region20: #{net_forward.1} parent=0 // pred_region
    _
  $region21: #{net_forward.1} parent=0 // pred_fallthru
    _
  // Predicated region
  $region22: #{net_forward.1} parent=0 // pred_check
    _
  $region23: #{net_forward.1} parent=0 // pred_check_branch
    %23 = sbr.rel (0) target = $region25
  $region24: #{net_forward.1} parent=0 // pred_region
    _
  $region25: #{net_forward.1} parent=0 // pred_fallthru
    _
  // Predicated region
  $region26: #{net_forward.1} parent=0 // pred_check
    _
  $region27: #{net_forward.1} parent=0 // pred_check_branch
    %25 = sbr.rel (0) target = $region29
  $region28: #{net_forward.1} parent=0 // pred_region
    _
  $region29: #{net_forward.1} parent=0 // pred_fallthru
    _
  %v26 = vld [vmem:[%s0] sm:$0xf]
  %v27 = vld [vmem:[%s1] sm:$0xff]
  %v28 = vld [vmem:[%s1 + $0x8] sm:$0xff]
  %v29 = vld [vmem:[%s1 + $0x10] sm:$0xf]
  %v30 = vld [vmem:[%s2] sm:$0xff]
  %v31 = vld [vmem:[%s2 + $0x8] sm:$0xff]
  %v32 = vld [vmem:[%s2 + $0x10] sm:$0xf]
  %34 = vset.pattern.permute.xlu0 0
  %35 = vperm.xlu0 %34, %v30
  %v36 = vpop.permute.xlu0 %35
  %39 = vset.pattern.permute.xlu0 0
  %40 = vperm.xlu0 %39, %v31
  %v41 = vpop.permute.xlu0 %40
  %44 = vset.pattern.permute.xlu0 0
  %45 = vperm.xlu0 %44, %v32
  %v46 = vpop.permute.xlu0 %45
  %vm48 = vcmask 31744
  %v50 = vsel %vm48, %v27, 0
  %v53 = vsel %vm48, %v28, 0
  %v56 = vsel %vm48, %v29, 0
  %vm58 = vcmask 1043456
  %v60 = vsel %vm58, %v26, 0
  %62 = vmatprep.subr.mxu0 0.0
  %63 = vmatpush1.msra.mxu0 %v60
  %64 = vmatprep.subr.mxu0 0.0
  %65 = vmatpush1.msra.mxu0 0.0
  %66 = vmatprep.subr.mxu0 0.0
  %67 = vmatpush1.msra.mxu0 0.0
  %68 = vmatprep.subr.mxu0 0.0
  %69 = vmatpush1.msra.mxu0 0.0
  %70 = vmatprep.subr.mxu0 0.0
  %71 = vmatpush1.msra.mxu0 0.0
  %72 = vmatprep.subr.mxu0 0.0
  %73 = vmatpush1.msra.mxu0 0.0
  %74 = vmatprep.subr.mxu0 0.0
  %75 = vmatpush1.msra.mxu0 0.0
  %76 = vmatprep.subr.mxu0 0.0
  %77 = vmatpush1.msra.mxu0 0.0
  %78 = vmatprep.subr.mxu0 0.0
  %79 = vmatpush1.msra.mxu0 0.0
  %80 = vmatprep.subr.mxu0 0.0
  %81 = vmatpush1.msra.mxu0 0.0
  %82 = vmatprep.subr.mxu0 0.0
  %83 = vmatpush1.msra.mxu0 0.0
  %84 = vmatprep.subr.mxu0 0.0
  %85 = vmatpush1.msra.mxu0 0.0
  %86 = vmatprep.subr.mxu0 0.0
  %87 = vmatpush1.msra.mxu0 0.0
  %88 = vmatprep.subr.mxu0 0.0
  %89 = vmatpush1.msra.mxu0 0.0
  %90 = vmatprep.subr.mxu0 0.0
  %91 = vmatpush1.msra.mxu0 0.0
  %92 = vmatprep.subr.mxu0 0.0
  %93 = vmatpush1.msra.mxu0 0.0
  %94 = vmatprep.subr.mxu0 0.0
  %95 = vmatpush1.msra.mxu0 0.0
  %96 = vmatprep.subr.mxu0 0.0
  %97 = vmatpush1.msra.mxu0 0.0
  %98 = vmatprep.subr.mxu0 0.0
  %99 = vmatpush1.msra.mxu0 0.0
  %100 = vmatprep.subr.mxu0 0.0
  %101 = vmatpush1.msra.mxu0 0.0
  %102 = vmatprep.subr.mxu0 0.0
  %103 = vmatpush1.msra.mxu0 0.0
  %104 = vmatprep.subr.mxu0 0.0
  %105 = vmatpush1.msra.mxu0 0.0
  %106 = vmatprep.subr.mxu0 0.0
  %107 = vmatpush1.msra.mxu0 0.0
  %108 = vmatprep.subr.mxu0 0.0
  %109 = vmatpush1.msra.mxu0 0.0
  %110 = vmatprep.subr.mxu0 0.0
  %111 = vmatpush1.msra.mxu0 0.0
  %112 = vmatprep.subr.mxu0 0.0
  %113 = vmatpush1.msra.mxu0 0.0
  %114 = vmatprep.subr.mxu0 0.0
  %115 = vmatpush1.msra.mxu0 0.0
  %116 = vmatprep.subr.mxu0 0.0
  %117 = vmatpush1.msra.mxu0 0.0
  %118 = vmatprep.subr.mxu0 0.0
  %119 = vmatpush1.msra.mxu0 0.0
  %120 = vmatprep.subr.mxu0 0.0
  %121 = vmatpush1.msra.mxu0 0.0
  %122 = vmatprep.subr.mxu0 0.0
  %123 = vmatpush1.msra.mxu0 0.0
  %124 = vmatprep.subr.mxu0 0.0
  %125 = vmatpush1.msra.mxu0 0.0
  %126 = vmatprep.mubr.f32.mxu0 0.0
  %127 = vmatmul.mubr.f32.gmra.mrb[0].mxu0 %v50
  %v128 = vpop.f32.mrb[0].mxu0
  %v129 = vadd.f32 %v36, %v128
  %v130 = vpop.f32.mrb[0].mxu0
  %131 = vmatprep.mubr.f32.mxu0 0.0
  %132 = vmatmul.mubr.f32.gmra.mrb[0].mxu0 %v53
  %v133 = vpop.f32.mrb[0].mxu0
  %v134 = vadd.f32 %v41, %v133
  %v135 = vpop.f32.mrb[0].mxu0
  %136 = vmatprep.mubr.f32.mxu0 0.0
  %137 = vmatmul.mubr.f32.gmra.mrb[0].mxu0 %v56
  %v138 = vpop.f32.mrb[0].mxu0
  %v139 = vadd.f32 %v46, %v138
  %v140 = vpop.f32.mrb[0].mxu0
  %141 = vdwg.mxu0
  %v142 = vmax.f32 %v129, 0.0
  %v143 = vmax.f32 %v134, 0.0
  %v144 = vmax.f32 %v139, 0.0
  %v145 = vld [vmem:[%s3] sm:$0xff]
  %v146 = vld [vmem:[%s3 + $0x8] sm:$0x3]
  %v147 = vld [vmem:[%s4] sm:$0xff]
  %v148 = vld [vmem:[%s4 + $0x8] sm:$0x3]
  %150 = vset.pattern.permute.xlu0 0
  %151 = vperm.xlu0 %150, %v147
  %v152 = vpop.permute.xlu0 %151
  %155 = vset.pattern.permute.xlu0 0
  %156 = vperm.xlu0 %155, %v148
  %v157 = vpop.permute.xlu0 %156
  %vm159 = vcmask 162816
  %v161 = vsel %vm159, %v145, 0
  %v164 = vsel %vm159, %v146, 0
  %v167 = vsel %vm58, %v144, 0
  %169 = vmatprep.subr.mxu0 0.0
  %170 = vmatpush1.msra.mxu0 %v142
  %171 = vmatprep.subr.mxu0 0.0
  %172 = vmatpush1.msra.mxu0 %v143
  %173 = vmatprep.subr.mxu0 0.0
  %174 = vmatpush1.msra.mxu0 %v167
  %175 = vmatprep.subr.mxu0 0.0
  %176 = vmatpush1.msra.mxu0 0.0
  %177 = vmatprep.subr.mxu0 0.0
  %178 = vmatpush1.msra.mxu0 0.0
  %179 = vmatprep.subr.mxu0 0.0
  %180 = vmatpush1.msra.mxu0 0.0
  %181 = vmatprep.subr.mxu0 0.0
  %182 = vmatpush1.msra.mxu0 0.0
  %183 = vmatprep.subr.mxu0 0.0
  %184 = vmatpush1.msra.mxu0 0.0
  %185 = vmatprep.subr.mxu0 0.0
  %186 = vmatpush1.msra.mxu0 0.0
  %187 = vmatprep.subr.mxu0 0.0
  %188 = vmatpush1.msra.mxu0 0.0
  %189 = vmatprep.subr.mxu0 0.0
  %190 = vmatpush1.msra.mxu0 0.0
  %191 = vmatprep.subr.mxu0 0.0
  %192 = vmatpush1.msra.mxu0 0.0
  %193 = vmatprep.subr.mxu0 0.0
  %194 = vmatpush1.msra.mxu0 0.0
  %195 = vmatprep.subr.mxu0 0.0
  %196 = vmatpush1.msra.mxu0 0.0
  %197 = vmatprep.subr.mxu0 0.0
  %198 = vmatpush1.msra.mxu0 0.0
  %199 = vmatprep.subr.mxu0 0.0
  %200 = vmatpush1.msra.mxu0 0.0
  %201 = vmatprep.subr.mxu0 0.0
  %202 = vmatpush1.msra.mxu0 0.0
  %203 = vmatprep.subr.mxu0 0.0
  %204 = vmatpush1.msra.mxu0 0.0
  %205 = vmatprep.subr.mxu0 0.0
  %206 = vmatpush1.msra.mxu0 0.0
  %207 = vmatprep.subr.mxu0 0.0
  %208 = vmatpush1.msra.mxu0 0.0
  %209 = vmatprep.subr.mxu0 0.0
  %210 = vmatpush1.msra.mxu0 0.0
  %211 = vmatprep.subr.mxu0 0.0
  %212 = vmatpush1.msra.mxu0 0.0
  %213 = vmatprep.subr.mxu0 0.0
  %214 = vmatpush1.msra.mxu0 0.0
  %215 = vmatprep.subr.mxu0 0.0
  %216 = vmatpush1.msra.mxu0 0.0
  %217 = vmatprep.subr.mxu0 0.0
  %218 = vmatpush1.msra.mxu0 0.0
  %219 = vmatprep.subr.mxu0 0.0
  %220 = vmatpush1.msra.mxu0 0.0
  %221 = vmatprep.subr.mxu0 0.0
  %222 = vmatpush1.msra.mxu0 0.0
  %223 = vmatprep.subr.mxu0 0.0
  %224 = vmatpush1.msra.mxu0 0.0
  %225 = vmatprep.subr.mxu0 0.0
  %226 = vmatpush1.msra.mxu0 0.0
  %227 = vmatprep.subr.mxu0 0.0
  %228 = vmatpush1.msra.mxu0 0.0
  %229 = vmatprep.subr.mxu0 0.0
  %230 = vmatpush1.msra.mxu0 0.0
  %231 = vmatprep.subr.mxu0 0.0
  %232 = vmatpush1.msra.mxu0 0.0
  %233 = vmatprep.mubr.f32.mxu0 0.0
  %234 = vmatmul.mubr.f32.gmra.mrb[0].mxu0 %v161
  %v235 = vpop.f32.mrb[0].mxu0
  %v236 = vadd.f32 %v152, %v235
  %v237 = vpop.f32.mrb[0].mxu0
  %238 = vmatprep.mubr.f32.mxu0 0.0
  %239 = vmatmul.mubr.f32.gmra.mrb[0].mxu0 %v164
  %v240 = vpop.f32.mrb[0].mxu0
  %v241 = vadd.f32 %v157, %v240
  %v242 = vpop.f32.mrb[0].mxu0
  %243 = vdwg.mxu0
  %v244 = vmax.f32 %v236, 0.0
  %v245 = vmax.f32 %v241, 0.0
  %v246 = vld [vmem:[%s5] sm:$0x7]
  %v247 = vld [vmem:[%s6] sm:$0x7]
  %249 = vset.pattern.permute.xlu0 0
  %250 = vperm.xlu0 %249, %v247
  %v251 = vpop.permute.xlu0 %250
  %vm253 = vcmask 80896
  %v255 = vsel %vm253, %v246, 0
  %vm257 = vcmask 1041408
  %v259 = vsel %vm257, %v245, 0
  %261 = vmatprep.subr.mxu0 0.0
  %262 = vmatpush1.msra.mxu0 %v244
  %263 = vmatprep.subr.mxu0 0.0
  %264 = vmatpush1.msra.mxu0 %v259
  %265 = vmatprep.subr.mxu0 0.0
  %266 = vmatpush1.msra.mxu0 0.0
  %267 = vmatprep.subr.mxu0 0.0
  %268 = vmatpush1.msra.mxu0 0.0
  %269 = vmatprep.subr.mxu0 0.0
  %270 = vmatpush1.msra.mxu0 0.0
  %271 = vmatprep.subr.mxu0 0.0
  %272 = vmatpush1.msra.mxu0 0.0
  %273 = vmatprep.subr.mxu0 0.0
  %274 = vmatpush1.msra.mxu0 0.0
  %275 = vmatprep.subr.mxu0 0.0
  %276 = vmatpush1.msra.mxu0 0.0
  %277 = vmatprep.subr.mxu0 0.0
  %278 = vmatpush1.msra.mxu0 0.0
  %279 = vmatprep.subr.mxu0 0.0
  %280 = vmatpush1.msra.mxu0 0.0
  %281 = vmatprep.subr.mxu0 0.0
  %282 = vmatpush1.msra.mxu0 0.0
  %283 = vmatprep.subr.mxu0 0.0
  %284 = vmatpush1.msra.mxu0 0.0
  %285 = vmatprep.subr.mxu0 0.0
  %286 = vmatpush1.msra.mxu0 0.0
  %287 = vmatprep.subr.mxu0 0.0
  %288 = vmatpush1.msra.mxu0 0.0
  %289 = vmatprep.subr.mxu0 0.0
  %290 = vmatpush1.msra.mxu0 0.0
  %291 = vmatprep.subr.mxu0 0.0
  %292 = vmatpush1.msra.mxu0 0.0
  %293 = vmatprep.subr.mxu0 0.0
  %294 = vmatpush1.msra.mxu0 0.0
  %295 = vmatprep.subr.mxu0 0.0
  %296 = vmatpush1.msra.mxu0 0.0
  %297 = vmatprep.subr.mxu0 0.0
  %298 = vmatpush1.msra.mxu0 0.0
  %299 = vmatprep.subr.mxu0 0.0
  %300 = vmatpush1.msra.mxu0 0.0
  %301 = vmatprep.subr.mxu0 0.0
  %302 = vmatpush1.msra.mxu0 0.0
  %303 = vmatprep.subr.mxu0 0.0
  %304 = vmatpush1.msra.mxu0 0.0
  %305 = vmatprep.subr.mxu0 0.0
  %306 = vmatpush1.msra.mxu0 0.0
  %307 = vmatprep.subr.mxu0 0.0
  %308 = vmatpush1.msra.mxu0 0.0
  %309 = vmatprep.subr.mxu0 0.0
  %310 = vmatpush1.msra.mxu0 0.0
  %311 = vmatprep.subr.mxu0 0.0
  %312 = vmatpush1.msra.mxu0 0.0
  %313 = vmatprep.subr.mxu0 0.0
  %314 = vmatpush1.msra.mxu0 0.0
  %315 = vmatprep.subr.mxu0 0.0
  %316 = vmatpush1.msra.mxu0 0.0
  %317 = vmatprep.subr.mxu0 0.0
  %318 = vmatpush1.msra.mxu0 0.0
  %319 = vmatprep.subr.mxu0 0.0
  %320 = vmatpush1.msra.mxu0 0.0
  %321 = vmatprep.subr.mxu0 0.0
  %322 = vmatpush1.msra.mxu0 0.0
  %323 = vmatprep.subr.mxu0 0.0
  %324 = vmatpush1.msra.mxu0 0.0
  %325 = vmatprep.mubr.f32.mxu0 0.0
  %326 = vmatmul.mubr.f32.gmra.mrb[0].mxu0 %v255
  %v327 = vpop.f32.mrb[0].mxu0
  %v328 = vadd.f32 %v251, %v327
  %v329 = vpop.f32.mrb[0].mxu0
  %330 = vdwg.mxu0
  %v331 = vmax.f32 %v328, 0.0
  %332 = vst [vmem:[%s7] sm:$0x7] %v331
  // Predicated region
  $region30: #{net_forward.1} parent=0 // pred_check
    _
  $region31: #{net_forward.1} parent=0 // pred_check_branch
    %334 = sbr.rel (0) target = $region33
  $region32: #{net_forward.1} parent=0 // pred_region
    _
  $region33: #{net_forward.1} parent=0 // pred_fallthru
    _
  // Predicated region
  $region34: #{net_forward.1} parent=0 // pred_check
    _
  $region35: #{net_forward.1} parent=0 // pred_check_branch
    %336 = sbr.rel (0) target = $region37
  $region36: #{net_forward.1} parent=0 // pred_region
    _
  $region37: #{net_forward.1} parent=0 // pred_fallthru
    _

</llo_original>
